<compile_context>
chip_gen: v6e
topology: v6e:2x2x1
jax: 0.10.0
libtpu: 0.0.40
codegen_flags: <defaults>
</compile_context>

<pallas_src>
import jax
import jax.numpy as jnp
from jax.experimental import pallas as pl
from jax.experimental.pallas import tpu as pltpu

K_SA = 7           # spatial-attention kernel size
P_SA = K_SA // 2   # padding = 3


def att_block_kernel(x_ref, w1t_ref, w2t_ref, cm_ref, wdst_ref, o_ref):
    """One batch element, channels-on-sublanes layout.

    x_ref   : (C, HW)     VMEM  input features (C on sublanes, H*W on lanes)
    w1t_ref : (Cr, C)     VMEM  channel-attention FC1 weights, transposed
    w2t_ref : (C, Cr)     VMEM  channel-attention FC2 weights, transposed
    cm_ref  : (2*HW, HW)  VMEM  7x7 spatial conv as a Toeplitz matrix [avg; max]
    wdst_ref: (Cout, C)   VMEM  1x1 downsample conv weights, transposed
    o_ref   : (Cout, HW)  VMEM  lane-dense output slab
    """
    x = x_ref[...]                                        # (C, HW) f32

    # ---------------- Channel attention ----------------
    # global avg / max pool over the spatial (lane) axis -> (C, 1)
    avg = jnp.mean(x, axis=1, keepdims=True)
    mx = jnp.max(x, axis=1, keepdims=True)
    pooled = jnp.concatenate([avg, mx], axis=1)           # (C, 2)

    # fused shared MLP: both pooled vectors go through FC1/ReLU/FC2 as the two
    # columns of one matmul pair (ReLU is per-column, so this is exact).
    h = jnp.maximum(
        jnp.dot(w1t_ref[...], pooled, preferred_element_type=jnp.float32), 0.0)   # (Cr, 2)
    a2 = jnp.dot(w2t_ref[...], h, preferred_element_type=jnp.float32)             # (C, 2)
    ca = jax.nn.sigmoid(jnp.sum(a2, axis=1, keepdims=True))                       # (C, 1)
    y = x * ca                                            # lane-broadcast, full VPU lanes

    # ---------------- Spatial attention ----------------
    avg_c = jnp.mean(y, axis=0, keepdims=True)            # (1, HW)  sublane reduce
    max_c = jnp.max(y, axis=0, keepdims=True)             # (1, HW)
    feat = jnp.concatenate([avg_c, max_c], axis=1)        # (1, 2*HW)
    # 7x7 / padding=3 conv of the 2-channel map == feat @ Toeplitz matrix (MXU)
    s = jnp.dot(feat, cm_ref[...], preferred_element_type=jnp.float32)            # (1, HW)
    z = y * jax.nn.sigmoid(s)                             # sublane-broadcast

    # ---------------- 1x1 downsample conv ----------------
    # single matmul, single full-block lane-dense store
    o_ref[...] = jnp.dot(wdst_ref[...], z, preferred_element_type=jnp.float32)


def build_sa_conv_matrix(w_sa_flat, H, W):
    """Build M (2*H*W, H*W) so that  conv7x7(pad=3)([avg;max]).flatten()
    == concat([avg.flatten(), max.flatten()]) @ M.   Weight preprocessing only."""
    K, P = K_SA, P_SA
    HW = H * W
    w2 = w_sa_flat.reshape(2, K, K).astype(jnp.float32)   # [avg-ch, max-ch]
    pi = jnp.arange(H)[:, None, None, None]               # input row
    pj = jnp.arange(W)[None, :, None, None]               # input col
    qi = jnp.arange(H)[None, None, :, None]               # output row
    qj = jnp.arange(W)[None, None, None, :]               # output col
    di = pi - qi + P
    dj = pj - qj + P
    valid = (di >= 0) & (di < K) & (dj >= 0) & (dj < K)   # (H, W, H, W)
    di_c = jnp.clip(di, 0, K - 1)
    dj_c = jnp.clip(dj, 0, K - 1)
    taps = w2[:, di_c, dj_c]                               # (2, H, W, H, W)
    taps = jnp.where(valid[None], taps, 0.0)
    return taps.reshape(2 * HW, HW)                        # rows: [avg block ; max block]


def att_block(x_nchw, w1, w2, w_sa_flat, w_ds):
    """x_nchw: (N, C, H, W) f32. Returns (N, Cout, H, W) f32."""
    N, C, H, W = x_nchw.shape
    HW = H * W
    Cr = w1.shape[1]
    Cout = w_ds.shape[1]

    xf = x_nchw.reshape(N, C, HW).astype(jnp.float32)          # no transpose needed
    w1t = jnp.transpose(w1).astype(jnp.float32)                # (Cr, C)
    w2t = jnp.transpose(w2).astype(jnp.float32)                # (C, Cr)
    wdst = jnp.transpose(w_ds).astype(jnp.float32)             # (Cout, C)
    conv_mat = build_sa_conv_matrix(w_sa_flat, H, W)           # (2*HW, HW)

    out = pl.pallas_call(
        att_block_kernel,
        out_shape=jax.ShapeDtypeStruct((N, Cout, HW), jnp.float32),
        grid=(N,),
        in_specs=[
            pl.BlockSpec((None, C, HW), lambda n: (n, 0, 0)),       # x (per batch)
            pl.BlockSpec((Cr, C), lambda n: (0, 0)),                # w1^T
            pl.BlockSpec((C, Cr), lambda n: (0, 0)),                # w2^T
            pl.BlockSpec((2 * HW, HW), lambda n: (0, 0)),           # conv Toeplitz
            pl.BlockSpec((Cout, C), lambda n: (0, 0)),              # w_ds^T
        ],
        out_specs=pl.BlockSpec((None, Cout, HW), lambda n: (n, 0, 0)),
        compiler_params=pltpu.CompilerParams(
            dimension_semantics=("parallel",)),                     # megacore on v7x
    )(xf, w1t, w2t, conv_mat, wdst)

    return out.reshape(N, Cout, H, W)


def att_block_ref(x, w1, w2, w_sa_flat, w_ds):
    """Pure-JAX reference mirroring the PyTorch NCHW forward."""
    # channel attention
    avg = jnp.mean(x, axis=(2, 3))                        # (N, C)
    mx = jnp.max(x, axis=(2, 3))
    fc = lambda v: jnp.maximum(v @ w1, 0.0) @ w2
    ca = jax.nn.sigmoid(fc(avg) + fc(mx))
    y = x * ca[:, :, None, None]
    # spatial attention (the SpatialAttention module forward)
    feat = jnp.stack([jnp.mean(y, axis=1), jnp.max(y, axis=1)], axis=1)  # (N,2,H,W)
    w_sa = w_sa_flat.reshape(1, 2, K_SA, K_SA)
    conv = jax.lax.conv_general_dilated(
        feat, w_sa, window_strides=(1, 1),
        padding=[(P_SA, P_SA), (P_SA, P_SA)],
        dimension_numbers=("NCHW", "OIHW", "NCHW"))
    z = y * jax.nn.sigmoid(conv)
    # 1x1 downsample
    return jnp.einsum("nchw,co->nohw", z, w_ds)


if __name__ == "__main__":
    # AttBlock(in_size=32, out_size=16): ratio=16 -> hidden channels Cr=2,
    # downsample 1x1 conv is created because in_size != out_size.
    N, C, Cout, H, W = 2, 32, 16, 16, 16
    ratio = 16
    Cr = C // ratio

    key = jax.random.PRNGKey(0)
    k1, k2, k3, k4, k5 = jax.random.split(key, 5)
    x = jax.random.normal(k1, (N, C, H, W), jnp.float32)
    w1 = jax.random.normal(k2, (C, Cr), jnp.float32) * 0.1     # fc1 (C -> Cr)
    w2 = jax.random.normal(k3, (Cr, C), jnp.float32) * 0.1     # fc2 (Cr -> C)
    w_sa = jax.random.normal(k4, (2 * K_SA * K_SA,), jnp.float32) * 0.1  # 7x7, 2->1
    w_ds = jax.random.normal(k5, (C, Cout), jnp.float32) * 0.1  # downsample 1x1

    out = att_block(x, w1, w2, w_sa, w_ds)
    out = jax.block_until_ready(out)
    assert out.shape == (N, Cout, H, W)

    ref = att_block_ref(x, w1, w2, w_sa, w_ds)
    assert jnp.allclose(out, ref, atol=2e-3, rtol=2e-3), \
        float(jnp.max(jnp.abs(out - ref)))

    print("KERNEL_OK")
</pallas_src>

<mosaic_0001>
module attributes {stable_mosaic.version = 11 : i64} {
  func.func @att_block_kernel(%arg0: i32, %arg1: memref<1x32x256xf32, #tpu.memory_space<vmem>>, %arg2: memref<2x32xf32, #tpu.memory_space<vmem>>, %arg3: memref<32x2xf32, #tpu.memory_space<vmem>>, %arg4: memref<512x256xf32, #tpu.memory_space<vmem>>, %arg5: memref<16x32xf32, #tpu.memory_space<vmem>>, %arg6: memref<1x16x256xf32, #tpu.memory_space<vmem>>) attributes {dimension_semantics = [#tpu.dimension_semantics<parallel>], iteration_bounds = array<i64: 2>, scalar_prefetch = 0 : i64, scratch_operands = 0 : i64, tpu.core_type = #tpu.core_type<tc>, window_params = [{transform_indices = @transform_0, window_bounds = array<i64: 1, 32, 256>}, {pipeline_mode = #tpu.pipeline_mode<synchronous>, transform_indices = @transform_1, window_bounds = array<i64: 2, 32>}, {pipeline_mode = #tpu.pipeline_mode<synchronous>, transform_indices = @transform_2, window_bounds = array<i64: 32, 2>}, {pipeline_mode = #tpu.pipeline_mode<synchronous>, transform_indices = @transform_3, window_bounds = array<i64: 512, 256>}, {pipeline_mode = #tpu.pipeline_mode<synchronous>, transform_indices = @transform_4, window_bounds = array<i64: 16, 32>}, {transform_indices = @transform_5, window_bounds = array<i64: 1, 16, 256>}]} {
    %c0 = arith.constant 0 : index
    %c0_0 = arith.constant 0 : index
    %c0_1 = arith.constant 0 : index
    %0 = vector.load %arg1[%c0, %c0_0, %c0_1] : memref<1x32x256xf32, #tpu.memory_space<vmem>>, vector<1x32x256xf32>
    %1 = vector.shape_cast %0 : vector<1x32x256xf32> to vector<32x256xf32>
    %cst = arith.constant dense<0.000000e+00> : vector<32xf32>
    %2 = vector.multi_reduction <add>, %1, %cst [1] : vector<32x256xf32> to vector<32xf32>
    %3 = vector.shape_cast %2 : vector<32xf32> to vector<32x1xf32>
    %cst_2 = arith.constant 2.560000e+02 : f32
    %4 = vector.broadcast %cst_2 : f32 to vector<32x1xf32>
    %5 = arith.divf %3, %4 : vector<32x1xf32>
    %cst_3 = arith.constant dense<0xFF800000> : vector<32xf32>
    %6 = vector.multi_reduction <maximumf>, %1, %cst_3 [1] : vector<32x256xf32> to vector<32xf32>
    %7 = vector.shape_cast %6 : vector<32xf32> to vector<32x1xf32>
    %8 = tpu.concatenate %5, %7 in 1 : vector<32x1xf32>, vector<32x1xf32> -> vector<32x2xf32>
    %c0_4 = arith.constant 0 : index
    %c0_5 = arith.constant 0 : index
    %9 = vector.load %arg2[%c0_4, %c0_5] : memref<2x32xf32, #tpu.memory_space<vmem>>, vector<2x32xf32>
    %cst_6 = arith.constant dense<0.000000e+00> : vector<2x2xf32>
    %10 = tpu.matmul %9, %8, %cst_6 {dimension_numbers = #tpu.dot_dimension_numbers<[1], [0], [0], [1], [0, 0, 1, 1], [], []>} : vector<2x32xf32>, vector<32x2xf32>, vector<2x2xf32> -> vector<2x2xf32>
    %cst_7 = arith.constant 0.000000e+00 : f32
    %11 = vector.broadcast %cst_7 : f32 to vector<2x2xf32>
    %12 = arith.maximumf %10, %11 : vector<2x2xf32>
    %c0_8 = arith.constant 0 : index
    %c0_9 = arith.constant 0 : index
    %13 = vector.load %arg3[%c0_8, %c0_9] : memref<32x2xf32, #tpu.memory_space<vmem>>, vector<32x2xf32>
    %cst_10 = arith.constant dense<0.000000e+00> : vector<32x2xf32>
    %14 = tpu.matmul %13, %12, %cst_10 {dimension_numbers = #tpu.dot_dimension_numbers<[1], [0], [0], [1], [0, 0, 1, 1], [], []>} : vector<32x2xf32>, vector<2x2xf32>, vector<32x2xf32> -> vector<32x2xf32>
    %cst_11 = arith.constant dense<0.000000e+00> : vector<32xf32>
    %15 = vector.multi_reduction <add>, %14, %cst_11 [1] : vector<32x2xf32> to vector<32xf32>
    %16 = vector.shape_cast %15 : vector<32xf32> to vector<32x1xf32>
    %17 = arith.negf %16 : vector<32x1xf32>
    %18 = math.exp %17 : vector<32x1xf32>
    %cst_12 = arith.constant 1.000000e+00 : f32
    %19 = vector.broadcast %cst_12 : f32 to vector<32x1xf32>
    %20 = arith.addf %19, %18 : vector<32x1xf32>
    %21 = arith.divf %19, %20 : vector<32x1xf32>
    %22 = vector.broadcast %21 : vector<32x1xf32> to vector<32x256xf32>
    %23 = arith.mulf %1, %22 : vector<32x256xf32>
    %cst_13 = arith.constant dense<0.000000e+00> : vector<256xf32>
    %24 = vector.multi_reduction <add>, %23, %cst_13 [0] : vector<32x256xf32> to vector<256xf32>
    %25 = vector.shape_cast %24 : vector<256xf32> to vector<1x256xf32>
    %cst_14 = arith.constant 3.200000e+01 : f32
    %26 = vector.broadcast %cst_14 : f32 to vector<1x256xf32>
    %27 = arith.divf %25, %26 : vector<1x256xf32>
    %cst_15 = arith.constant dense<0xFF800000> : vector<256xf32>
    %28 = vector.multi_reduction <maximumf>, %23, %cst_15 [0] : vector<32x256xf32> to vector<256xf32>
    %29 = vector.shape_cast %28 : vector<256xf32> to vector<1x256xf32>
    %30 = tpu.concatenate %27, %29 in 1 : vector<1x256xf32>, vector<1x256xf32> -> vector<1x512xf32>
    %c0_16 = arith.constant 0 : index
    %c0_17 = arith.constant 0 : index
    %31 = vector.load %arg4[%c0_16, %c0_17] : memref<512x256xf32, #tpu.memory_space<vmem>>, vector<512x256xf32>
    %cst_18 = arith.constant dense<0.000000e+00> : vector<1x256xf32>
    %32 = tpu.matmul %30, %31, %cst_18 {dimension_numbers = #tpu.dot_dimension_numbers<[1], [0], [0], [1], [0, 0, 1, 1], [], []>} : vector<1x512xf32>, vector<512x256xf32>, vector<1x256xf32> -> vector<1x256xf32>
    %33 = arith.negf %32 : vector<1x256xf32>
    %34 = math.exp %33 : vector<1x256xf32>
    %cst_19 = arith.constant 1.000000e+00 : f32
    %35 = vector.broadcast %cst_19 : f32 to vector<1x256xf32>
    %36 = arith.addf %35, %34 : vector<1x256xf32>
    %37 = arith.divf %35, %36 : vector<1x256xf32>
    %38 = vector.broadcast %37 : vector<1x256xf32> to vector<32x256xf32>
    %39 = arith.mulf %23, %38 : vector<32x256xf32>
    %c0_20 = arith.constant 0 : index
    %c0_21 = arith.constant 0 : index
    %40 = vector.load %arg5[%c0_20, %c0_21] : memref<16x32xf32, #tpu.memory_space<vmem>>, vector<16x32xf32>
    %cst_22 = arith.constant dense<0.000000e+00> : vector<16x256xf32>
    %41 = tpu.matmul %40, %39, %cst_22 {dimension_numbers = #tpu.dot_dimension_numbers<[1], [0], [0], [1], [0, 0, 1, 1], [], []>} : vector<16x32xf32>, vector<32x256xf32>, vector<16x256xf32> -> vector<16x256xf32>
    %c0_23 = arith.constant 0 : index
    %c0_24 = arith.constant 0 : index
    %c0_25 = arith.constant 0 : index
    %42 = vector.load %arg6[%c0_23, %c0_24, %c0_25] : memref<1x16x256xf32, #tpu.memory_space<vmem>>, vector<1x16x256xf32>
    %43 = vector.shape_cast %42 : vector<1x16x256xf32> to vector<16x256xf32>
    %44 = vector.shape_cast %41 : vector<16x256xf32> to vector<1x16x256xf32>
    tpu.vector_store %arg6[%c0_23, %c0_24, %c0_25], %44 {strides = array<i32>} : memref<1x16x256xf32, #tpu.memory_space<vmem>>, vector<1x16x256xf32>,
    return
  }
  func.func @transform_0(%arg0: i32) -> (i32, i32, i32) {
    %c0_i32 = arith.constant 0 : i32
    %c0_i32_0 = arith.constant 0 : i32
    %c0_i32_1 = arith.constant 0 : i32
    return %arg0, %c0_i32, %c0_i32_0 : i32, i32, i32
  }
  func.func @transform_1(%arg0: i32) -> (i32, i32) {
    %c0_i32 = arith.constant 0 : i32
    %c0_i32_0 = arith.constant 0 : i32
    %c0_i32_1 = arith.constant 0 : i32
    return %c0_i32, %c0_i32_0 : i32, i32
  }
  func.func @transform_2(%arg0: i32) -> (i32, i32) {
    %c0_i32 = arith.constant 0 : i32
    %c0_i32_0 = arith.constant 0 : i32
    %c0_i32_1 = arith.constant 0 : i32
    return %c0_i32, %c0_i32_0 : i32, i32
  }
  func.func @transform_3(%arg0: i32) -> (i32, i32) {
    %c0_i32 = arith.constant 0 : i32
    %c0_i32_0 = arith.constant 0 : i32
    %c0_i32_1 = arith.constant 0 : i32
    return %c0_i32, %c0_i32_0 : i32, i32
  }
  func.func @transform_4(%arg0: i32) -> (i32, i32) {
    %c0_i32 = arith.constant 0 : i32
    %c0_i32_0 = arith.constant 0 : i32
    %c0_i32_1 = arith.constant 0 : i32
    return %c0_i32, %c0_i32_0 : i32, i32
  }
  func.func @transform_5(%arg0: i32) -> (i32, i32, i32) {
    %c0_i32 = arith.constant 0 : i32
    %c0_i32_0 = arith.constant 0 : i32
    %c0_i32_1 = arith.constant 0 : i32
    return %arg0, %c0_i32, %c0_i32_0 : i32, i32, i32
  }
}

</mosaic_0001>

<llo_original>
// kernel: tpu_custom_call.1
$region0: #{tpu_custom_call.1}
  #allocation0 [shape = 'u32[]', space=smem, size = 0x4, offset = 0x4, fixed_abs, tag = 'smem constant byte address 0x4 - core index']
  #allocation1 [shape = 'u32[144,128]{1,0:T(1,128)}', space=vmem, size = 0x12000, scoped, tag = 'internal scratch']
  %s0 = inlined_call_operand.hbm [shape: f32[2,32,256], index: 0, kind: input, shape index: {}]
  %s1 = inlined_call_operand.vmem [shape: f32[2,32], index: 1, kind: input, shape index: {}]
  %s2 = inlined_call_operand.vmem [shape: f32[32,2], index: 2, kind: input, shape index: {}]
  %s3 = inlined_call_operand.hbm [shape: f32[512,256], index: 3, kind: input, shape index: {}]
  %s4 = inlined_call_operand.vmem [shape: f32[16,32], index: 4, kind: input, shape index: {}]
  %s5 = inlined_call_operand.hbm [shape: f32[2,16,256], index: 5, kind: output, shape index: {}]
  %s6 = sld [smem:[#allocation0]]
  $region61: #{tpu_custom_call.1} parent=0
    _
  %s8 = ssub.s32 1, %s6
  %s9 = scalar_select 0, %s8, %s6
  $region1: #{tpu_custom_call.1} parent=0
    #allocation2 [shape = 'u8[65536]{0}', space=vmem, size = 0x10000, scoped, tag = 'input window, operand 0']
    #allocation3 [shape = 's32[2]{0}', space=sflag, size = 0x8, scoped, tag = 'scoped memory for tpu_custom_call.1']
    #allocation4 [shape = 's32[2]{0}', space=sflag, size = 0x8, scoped, tag = 'scoped memory for tpu_custom_call.1']
    #allocation5 [shape = 'u8[524288]{0}', space=vmem, size = 0x80000, scoped, tag = 'input window, operand 3, single buffered']
    #allocation6 [shape = 's32[1]{0}', space=sflag, size = 0x4, scoped, tag = 'scoped memory for tpu_custom_call.1']
    #allocation7 [shape = 'u8[32768]{0}', space=vmem, size = 0x8000, scoped, tag = 'output window, operand 0']
    %10 = vsyncpa [#allocation3], 0
    %s11 = scalar_lea.sflag [#allocation3], 1
    %12 = vsyncpa %s11, 0
    %13 = vsyncpa [#allocation6], 0
    %14 = vsyncpa [#allocation4], 0
    %s15 = scalar_lea.sflag [#allocation4], 1
    %16 = vsyncpa %s15, 0
    loop: start=0, step=1, limit=4
    $region2: #{tpu_custom_call.1} parent=1 // loop_pre_header
      _
    $region3: #{tpu_custom_call.1} parent=1 // loop_header
      %s18 = sphi 0, %s22
      %p19 = scmp.ge.s32.totalorder %s18, 4
      %s28 = sphi 0, %s30
      %s31 = sphi 0, %s28
      %s32 = sphi 0, %s31
      %s48 = sphi 0, %s32
      %s52 = sphi 0, %s52
      %s54 = sphi 0, %s52
      %s55 = sphi 0, %s54
      %s69 = sphi 0, %s55
      %s73 = sphi 0, %s73
      %s75 = sphi 0, %s73
      %s76 = sphi 0, %s75
      %s90 = sphi 0, %s76
      %s94 = sphi 0, %s94
      %s96 = sphi 0, %s94
      %s97 = sphi 0, %s96
      %s111 = sphi 0, %s97
      %s115 = sphi 0, %s115
      %s117 = sphi 0, %s115
      %s118 = sphi 0, %s117
      %s132 = sphi 0, %s118
      %s138 = sphi 0, %s140
      %s141 = sphi 0, %s138
      %s142 = sphi 0, %s141
      %s158 = sphi 0, %s142
    $region4: #{tpu_custom_call.1} parent=1 // loop_header_branch
      %21 = sbr.rel (%p19) target = $region8
    $region5: #{tpu_custom_call.1} parent=1 // loop_body
      %s23 = ssub.s32 %s18, 1
      %s24 = ssub.s32 %s18, 2
      %s25 = sadd.s32 %s18, 1
      %s26 = ssub.s32 %s18, %s25
      %p27 = scmp.eq.s32.totalorder %s26, 0
      %s29 = sadd.s32 %s28, 1
      %s30 = scalar_select %p27, %s28, %s29
      %p33 = pneg %p27
      %p34 = scmp.eq.s32.totalorder %s18, 1
      %p35 = por %p33, %p34
      %p36 = scmp.ne.s32.totalorder %s28, %s31
      %p37 = scmp.eq.s32.totalorder %s18, 0
      %p38 = por %p36, %p37
      %p39 = scmp.ne.s32.totalorder %s28, %s31
      %p40 = scmp.eq.s32.totalorder %s23, 1
      %p41 = por %p39, %p40
      %p42 = scmp.ne.s32.totalorder %s31, %s32
      %p43 = scmp.eq.s32.totalorder %s23, 0
      %p44 = por %p42, %p43
      %p45 = scmp.ne.s32.totalorder %s31, %s32
      %p46 = scmp.eq.s32.totalorder %s24, 1
      %p47 = por %p45, %p46
      %p49 = scmp.ne.s32.totalorder %s32, %s48
      %p50 = scmp.eq.s32.totalorder %s24, 0
      %p51 = por %p49, %p50
      %s53 = sadd.s32 %s52, 1
      %p56 = scmp.eq.s32.totalorder %s18, 1
      %p57 = scmp.ne.s32.totalorder %s52, %s54
      %p58 = scmp.eq.s32.totalorder %s18, 0
      %p59 = por %p57, %p58
      %p60 = scmp.ne.s32.totalorder %s52, %s54
      %p61 = scmp.eq.s32.totalorder %s23, 1
      %p62 = por %p60, %p61
      %p63 = scmp.ne.s32.totalorder %s54, %s55
      %p64 = scmp.eq.s32.totalorder %s23, 0
      %p65 = por %p63, %p64
      %p66 = scmp.ne.s32.totalorder %s54, %s55
      %p67 = scmp.eq.s32.totalorder %s24, 1
      %p68 = por %p66, %p67
      %p70 = scmp.ne.s32.totalorder %s55, %s69
      %p71 = scmp.eq.s32.totalorder %s24, 0
      %p72 = por %p70, %p71
      %s74 = sadd.s32 %s73, 1
      %p77 = scmp.eq.s32.totalorder %s18, 1
      %p78 = scmp.ne.s32.totalorder %s73, %s75
      %p79 = scmp.eq.s32.totalorder %s18, 0
      %p80 = por %p78, %p79
      %p81 = scmp.ne.s32.totalorder %s73, %s75
      %p82 = scmp.eq.s32.totalorder %s23, 1
      %p83 = por %p81, %p82
      %p84 = scmp.ne.s32.totalorder %s75, %s76
      %p85 = scmp.eq.s32.totalorder %s23, 0
      %p86 = por %p84, %p85
      %p87 = scmp.ne.s32.totalorder %s75, %s76
      %p88 = scmp.eq.s32.totalorder %s24, 1
      %p89 = por %p87, %p88
      %p91 = scmp.ne.s32.totalorder %s76, %s90
      %p92 = scmp.eq.s32.totalorder %s24, 0
      %p93 = por %p91, %p92
      %s95 = sadd.s32 %s94, 1
      %p98 = scmp.eq.s32.totalorder %s18, 1
      %p99 = scmp.ne.s32.totalorder %s94, %s96
      %p100 = scmp.eq.s32.totalorder %s18, 0
      %p101 = por %p99, %p100
      %p102 = scmp.ne.s32.totalorder %s94, %s96
      %p103 = scmp.eq.s32.totalorder %s23, 1
      %p104 = por %p102, %p103
      %p105 = scmp.ne.s32.totalorder %s96, %s97
      %p106 = scmp.eq.s32.totalorder %s23, 0
      %p107 = por %p105, %p106
      %p108 = scmp.ne.s32.totalorder %s96, %s97
      %p109 = scmp.eq.s32.totalorder %s24, 1
      %p110 = por %p108, %p109
      %p112 = scmp.ne.s32.totalorder %s97, %s111
      %p113 = scmp.eq.s32.totalorder %s24, 0
      %p114 = por %p112, %p113
      %s116 = sadd.s32 %s115, 1
      %p119 = scmp.eq.s32.totalorder %s18, 1
      %p120 = scmp.ne.s32.totalorder %s115, %s117
      %p121 = scmp.eq.s32.totalorder %s18, 0
      %p122 = por %p120, %p121
      %p123 = scmp.ne.s32.totalorder %s115, %s117
      %p124 = scmp.eq.s32.totalorder %s23, 1
      %p125 = por %p123, %p124
      %p126 = scmp.ne.s32.totalorder %s117, %s118
      %p127 = scmp.eq.s32.totalorder %s23, 0
      %p128 = por %p126, %p127
      %p129 = scmp.ne.s32.totalorder %s117, %s118
      %p130 = scmp.eq.s32.totalorder %s24, 1
      %p131 = por %p129, %p130
      %p133 = scmp.ne.s32.totalorder %s118, %s132
      %p134 = scmp.eq.s32.totalorder %s24, 0
      %p135 = por %p133, %p134
      %s136 = ssub.s32 %s18, %s25
      %p137 = scmp.eq.s32.totalorder %s136, 0
      %s139 = sadd.s32 %s138, 1
      %s140 = scalar_select %p137, %s138, %s139
      %p143 = pneg %p137
      %p144 = scmp.eq.s32.totalorder %s18, 1
      %p145 = por %p143, %p144
      %p146 = scmp.ne.s32.totalorder %s138, %s141
      %p147 = scmp.eq.s32.totalorder %s18, 0
      %p148 = por %p146, %p147
      %p149 = scmp.ne.s32.totalorder %s138, %s141
      %p150 = scmp.eq.s32.totalorder %s23, 1
      %p151 = por %p149, %p150
      %p152 = scmp.ne.s32.totalorder %s141, %s142
      %p153 = scmp.eq.s32.totalorder %s23, 0
      %p154 = por %p152, %p153
      %p155 = scmp.ne.s32.totalorder %s141, %s142
      %p156 = scmp.eq.s32.totalorder %s24, 1
      %p157 = por %p155, %p156
      %p159 = scmp.ne.s32.totalorder %s142, %s158
      %p160 = scmp.eq.s32.totalorder %s24, 0
      %p161 = por %p159, %p160
      %p162 = scmp.le.s32.totalorder 1, %s18
      %p163 = scmp.lt.s32.totalorder %s18, 3
      %p164 = pnand %p162, %p163
      %p165 = pneg %p164
      // Predicated region
      $region9: #{tpu_custom_call.1} parent=5 // pred_check
        _
      $region10: #{tpu_custom_call.1} parent=5 // pred_check_branch
        %167 = sbr.rel (%p164) target = $region12
      $region11: #{tpu_custom_call.1} parent=5 // pred_region
        %s168 = ssub.s32 %s18, 1
        // Predicated region
        $region13: #{tpu_custom_call.1} parent=11 // pred_check
          %p169 = pneg %p65
        $region14: #{tpu_custom_call.1} parent=11 // pred_check_branch
          %171 = sbr.rel (%p169) target = $region16
        $region15: #{tpu_custom_call.1} parent=11 // pred_region
          _
        $region16: #{tpu_custom_call.1} parent=11 // pred_fallthru
          _
        // Predicated region
        $region17: #{tpu_custom_call.1} parent=11 // pred_check
          %p172 = pneg %p86
        $region18: #{tpu_custom_call.1} parent=11 // pred_check_branch
          %174 = sbr.rel (%p172) target = $region20
        $region19: #{tpu_custom_call.1} parent=11 // pred_region
          _
        $region20: #{tpu_custom_call.1} parent=11 // pred_fallthru
          _
        // Predicated region
        $region21: #{tpu_custom_call.1} parent=11 // pred_check
          %p175 = pneg %p107
        $region22: #{tpu_custom_call.1} parent=11 // pred_check_branch
          %177 = sbr.rel (%p175) target = $region24
        $region23: #{tpu_custom_call.1} parent=11 // pred_region
          %s179 = ssub.s32 16384, 16384
          %180 = vsyncadd [#allocation6], %s179
          %s181 = sshll.u32 [#allocation5], 4
          %s182 = int_to_ptr.vmem [resolvable:$true] %s181
          %187 = dma.hbm_to_vmem [thread:$0]  %s3, 16384, %s182, [#allocation6], 256, 256, 16
        $region24: #{tpu_custom_call.1} parent=11 // pred_fallthru
          _
        // Predicated region
        $region25: #{tpu_custom_call.1} parent=11 // pred_check
          %p188 = pneg %p128
        $region26: #{tpu_custom_call.1} parent=11 // pred_check_branch
          %190 = sbr.rel (%p188) target = $region28
        $region27: #{tpu_custom_call.1} parent=11 // pred_region
          _
        $region28: #{tpu_custom_call.1} parent=11 // pred_fallthru
          _
      $region12: #{tpu_custom_call.1} parent=5 // pred_fallthru
        _
      %p191 = scmp.lt.s32.totalorder %s18, 2
      // Predicated region
      $region29: #{tpu_custom_call.1} parent=5 // pred_check
        %p192 = pneg %p191
      $region30: #{tpu_custom_call.1} parent=5 // pred_check_branch
        %194 = sbr.rel (%p192) target = $region32
      $region31: #{tpu_custom_call.1} parent=5 // pred_region
        // Predicated region
        $region33: #{tpu_custom_call.1} parent=31 // pred_check
          %p195 = pneg %p38
        $region34: #{tpu_custom_call.1} parent=31 // pred_check_branch
          %197 = sbr.rel (%p195) target = $region36
        $region35: #{tpu_custom_call.1} parent=31 // pred_region
          %s198 = sand.u32 %s28, 1
          %s199 = scalar_lea.sflag [#allocation3], %s198
          %s200 = sand.u32 %s28, 1
          %s201 = smul.addr %s200, 64
          %s202 = scalar_lea.vmem [#allocation2], %s201
          %s204 = ssub.s32 1024, 1024
          %205 = vsyncadd %s199, %s204
          %s206 = smul.addr %s18, 8
          %s207 = smul.addr %s206, 128
          %s208 = scalar_lea.hbm %s0, %s207
          %s209 = sshll.u32 %s202, 4
          %s210 = int_to_ptr.vmem [resolvable:$true] %s209
          %215 = dma.hbm_to_vmem [thread:$0]  %s208, 1024, %s210, %s199, 256, 256, 16
        $region36: #{tpu_custom_call.1} parent=31 // pred_fallthru
          _
      $region32: #{tpu_custom_call.1} parent=5 // pred_fallthru
        _
      %p216 = scmp.le.s32.totalorder 1, %s18
      %p217 = scmp.lt.s32.totalorder %s18, 3
      %p218 = pnand %p216, %p217
      %p219 = pneg %p218
      // Predicated region
      $region37: #{tpu_custom_call.1} parent=5 // pred_check
        _
      $region38: #{tpu_custom_call.1} parent=5 // pred_check_branch
        %221 = sbr.rel (%p218) target = $region40
      $region39: #{tpu_custom_call.1} parent=5 // pred_region
        %s222 = ssub.s32 %s18, 1
        %s223 = sand.u32 %s31, 1
        %s224 = scalar_lea.sflag [#allocation3], %s223
        %s225 = sand.u32 %s31, 1
        %s226 = smul.addr %s225, 64
        %s227 = scalar_lea.vmem [#allocation2], %s226
        // Predicated region
        $region41: #{tpu_custom_call.1} parent=39 // pred_check
          %p228 = pneg %p44
        $region42: #{tpu_custom_call.1} parent=39 // pred_check_branch
          %230 = sbr.rel (%p228) target = $region44
        $region43: #{tpu_custom_call.1} parent=39 // pred_region
          %231 = dma.done %s224, 1024
        $region44: #{tpu_custom_call.1} parent=39 // pred_fallthru
          _
        // Predicated region
        $region45: #{tpu_custom_call.1} parent=39 // pred_check
          %p232 = pneg %p107
        $region46: #{tpu_custom_call.1} parent=39 // pred_check_branch
          %234 = sbr.rel (%p232) target = $region48
        $region47: #{tpu_custom_call.1} parent=39 // pred_region
          %235 = dma.done [#allocation6], 16384
        $region48: #{tpu_custom_call.1} parent=39 // pred_fallthru
          _
        %s236 = sand.u32 %s31, 1
        %s237 = scalar_lea.sflag [#allocation3], %s236
        %s238 = sand.u32 %s31, 1
        %s239 = smul.addr %s238, 64
        %s240 = scalar_lea.vmem [#allocation2], %s239
        %p241 = pneg %p44
        %p242 = pneg %p41
        %p243 = pneg %p65
        %p244 = pneg %p62
        %p245 = pneg %p86
        %p246 = pneg %p83
        %p247 = pneg %p107
        %p248 = pneg %p104
        %p249 = pneg %p128
        %p250 = pneg %p125
        %p251 = pneg %p154
        %p252 = pneg %p151
        %s253 = sand.u32 %s141, 1
        %s254 = scalar_lea.sflag [#allocation4], %s253
        %s255 = sand.u32 %s141, 1
        %s256 = smul.addr %s255, 32
        %s257 = scalar_lea.vmem [#allocation7], %s256
        %v258 = vld [vmem:[%s227] sm:$0xff]
        %v259 = vld [vmem:[%s227 + $0x8] sm:$0xff]
        %v260 = vld [vmem:[%s227 + $0x10] sm:$0xff]
        %v261 = vld [vmem:[%s227 + $0x18] sm:$0xff]
        %v262 = vld [vmem:[%s227 + $0x20] sm:$0xff]
        %v263 = vld [vmem:[%s227 + $0x28] sm:$0xff]
        %v264 = vld [vmem:[%s227 + $0x30] sm:$0xff]
        %v265 = vld [vmem:[%s227 + $0x38] sm:$0xff]
        %v266 = vadd.f32 %v258, %v259
        %267 = vadd.xlane.f32.xlu0 %v266
        %v268 = vpop.xlane.xlu0 %267
        %v269 = vadd.f32 %v260, %v261
        %270 = vadd.xlane.f32.xlu0 %v269
        %v271 = vpop.xlane.xlu0 %270
        %v272 = vadd.f32 %v262, %v263
        %273 = vadd.xlane.f32.xlu0 %v272
        %v274 = vpop.xlane.xlu0 %273
        %v275 = vadd.f32 %v264, %v265
        %276 = vadd.xlane.f32.xlu0 %v275
        %v277 = vpop.xlane.xlu0 %276
        %v278 = vrcp.pop 256.0
        %v279 = vmul.f32 %v268, %v278
        %v280 = vmul.f32 %v271, %v278
        %v281 = vmul.f32 %v274, %v278
        %v282 = vmul.f32 %v277, %v278
        %v283 = vmax.f32 %v258, %v259
        %284 = vmax.xlane.f32.xlu0 %v283
        %v285 = vpop.xlane.xlu0 %284
        %v286 = vmax.f32 %v260, %v261
        %287 = vmax.xlane.f32.xlu0 %v286
        %v288 = vpop.xlane.xlu0 %287
        %v289 = vmax.f32 %v262, %v263
        %290 = vmax.xlane.f32.xlu0 %v289
        %v291 = vpop.xlane.xlu0 %290
        %v292 = vmax.f32 %v264, %v265
        %293 = vmax.xlane.f32.xlu0 %v292
        %v294 = vpop.xlane.xlu0 %293
        %vm295 = vcmask 7168
        %v296 = vsel %vm295, %v279, %v285
        %v297 = vsel %vm295, %v280, %v288
        %v298 = vsel %vm295, %v281, %v291
        %v299 = vsel %vm295, %v282, %v294
        %v300 = vld [vmem:[%s1] sm:$0x3]
        %vm301 = vcmask 261120
        %v303 = vsel %vm301, %v300, 0
        %305 = vmatprep.subr.mxu0 0.0
        %306 = vmatpush1.msra.mxu0 0.0
        %307 = vmatprep.subr.mxu0 0.0
        %308 = vmatpush1.msra.mxu0 0.0
        %309 = vmatprep.subr.mxu0 0.0
        %310 = vmatpush1.msra.mxu0 0.0
        %311 = vmatprep.subr.mxu0 0.0
        %312 = vmatpush1.msra.mxu0 0.0
        %313 = vmatprep.subr.mxu0 0.0
        %314 = vmatpush1.msra.mxu0 0.0
        %315 = vmatprep.subr.mxu0 0.0
        %316 = vmatpush1.msra.mxu0 0.0
        %317 = vmatprep.subr.mxu0 0.0
        %318 = vmatpush1.msra.mxu0 0.0
        %319 = vmatprep.subr.mxu0 0.0
        %320 = vmatpush1.msra.mxu0 0.0
        %321 = vmatprep.subr.mxu0 0.0
        %322 = vmatpush1.msra.mxu0 0.0
        %323 = vmatprep.subr.mxu0 0.0
        %324 = vmatpush1.msra.mxu0 0.0
        %325 = vmatprep.subr.mxu0 0.0
        %326 = vmatpush1.msra.mxu0 0.0
        %327 = vmatprep.subr.mxu0 0.0
        %328 = vmatpush1.msra.mxu0 0.0
        %329 = vmatprep.subr.mxu0 0.0
        %330 = vmatpush1.msra.mxu0 %v299
        %331 = vmatprep.subr.mxu0 0.0
        %332 = vmatpush1.msra.mxu0 %v298
        %333 = vmatprep.subr.mxu0 0.0
        %334 = vmatpush1.msra.mxu0 %v297
        %335 = vmatprep.subr.mxu0 0.0
        %336 = vmatpush1.msra.mxu0 %v296
        %337 = vmatprep.subr.mxu0 0.0
        %338 = vmatpush2.msra.mxu0 0.0
        %339 = vmatprep.subr.mxu0 0.0
        %340 = vmatpush2.msra.mxu0 0.0
        %341 = vmatprep.subr.mxu0 0.0
        %342 = vmatpush2.msra.mxu0 0.0
        %343 = vmatprep.subr.mxu0 0.0
        %344 = vmatpush2.msra.mxu0 0.0
        %345 = vmatprep.subr.mxu0 0.0
        %346 = vmatpush2.msra.mxu0 0.0
        %347 = vmatprep.subr.mxu0 0.0
        %348 = vmatpush2.msra.mxu0 0.0
        %349 = vmatprep.subr.mxu0 0.0
        %350 = vmatpush2.msra.mxu0 0.0
        %351 = vmatprep.subr.mxu0 0.0
        %352 = vmatpush2.msra.mxu0 0.0
        %353 = vmatprep.subr.mxu0 0.0
        %354 = vmatpush2.msra.mxu0 0.0
        %355 = vmatprep.subr.mxu0 0.0
        %356 = vmatpush2.msra.mxu0 0.0
        %357 = vmatprep.subr.mxu0 0.0
        %358 = vmatpush2.msra.mxu0 0.0
        %359 = vmatprep.subr.mxu0 0.0
        %360 = vmatpush2.msra.mxu0 0.0
        %361 = vmatprep.subr.mxu0 0.0
        %362 = vmatpush2.msra.mxu0 0.0
        %363 = vmatprep.subr.mxu0 0.0
        %364 = vmatpush2.msra.mxu0 0.0
        %365 = vmatprep.subr.mxu0 0.0
        %366 = vmatpush2.msra.mxu0 0.0
        %367 = vmatprep.subr.mxu0 0.0
        %368 = vmatpush2.msra.mxu0 0.0
        %369 = vmatprep.mubr.f32.mxu0 0.0
        %370 = vmatmul.mubr.f32.gmra.mxu0 %v303
        %v371 = vpop.f32.mrf.mxu0
        %v372 = vadd.f32 0.0, %v371
        %v373 = vpop.f32.mrf.mxu0
        %374 = vdwg.mxu0
        %v375 = vmax.f32 %v372, 0.0
        %v376 = vld [vmem:[%s2] sm:$0xff]
        %v377 = vld [vmem:[%s2 + $0x8] sm:$0xff]
        %v378 = vld [vmem:[%s2 + $0x10] sm:$0xff]
        %v379 = vld [vmem:[%s2 + $0x18] sm:$0xff]
        %vm380 = vcmask 15360
        %v382 = vsel %vm380, %v376, 0
        %v385 = vsel %vm380, %v377, 0
        %v388 = vsel %vm380, %v378, 0
        %v391 = vsel %vm380, %v379, 0
        %vm393 = vcmask 1041408
        %v395 = vsel %vm393, %v375, 0
        %397 = vmatprep.subr.mxu0 0.0
        %398 = vmatpush1.msra.mxu0 0.0
        %399 = vmatprep.subr.mxu0 0.0
        %400 = vmatpush1.msra.mxu0 0.0
        %401 = vmatprep.subr.mxu0 0.0
        %402 = vmatpush1.msra.mxu0 0.0
        %403 = vmatprep.subr.mxu0 0.0
        %404 = vmatpush1.msra.mxu0 0.0
        %405 = vmatprep.subr.mxu0 0.0
        %406 = vmatpush1.msra.mxu0 0.0
        %407 = vmatprep.subr.mxu0 0.0
        %408 = vmatpush1.msra.mxu0 0.0
        %409 = vmatprep.subr.mxu0 0.0
        %410 = vmatpush1.msra.mxu0 0.0
        %411 = vmatprep.subr.mxu0 0.0
        %412 = vmatpush1.msra.mxu0 0.0
        %413 = vmatprep.subr.mxu0 0.0
        %414 = vmatpush1.msra.mxu0 0.0
        %415 = vmatprep.subr.mxu0 0.0
        %416 = vmatpush1.msra.mxu0 0.0
        %417 = vmatprep.subr.mxu0 0.0
        %418 = vmatpush1.msra.mxu0 0.0
        %419 = vmatprep.subr.mxu0 0.0
        %420 = vmatpush1.msra.mxu0 0.0
        %421 = vmatprep.subr.mxu0 0.0
        %422 = vmatpush1.msra.mxu0 0.0
        %423 = vmatprep.subr.mxu0 0.0
        %424 = vmatpush1.msra.mxu0 0.0
        %425 = vmatprep.subr.mxu0 0.0
        %426 = vmatpush1.msra.mxu0 0.0
        %427 = vmatprep.subr.mxu0 0.0
        %428 = vmatpush1.msra.mxu0 %v395
        %429 = vmatprep.subr.mxu0 0.0
        %430 = vmatpush2.msra.mxu0 0.0
        %431 = vmatprep.subr.mxu0 0.0
        %432 = vmatpush2.msra.mxu0 0.0
        %433 = vmatprep.subr.mxu0 0.0
        %434 = vmatpush2.msra.mxu0 0.0
        %435 = vmatprep.subr.mxu0 0.0
        %436 = vmatpush2.msra.mxu0 0.0
        %437 = vmatprep.subr.mxu0 0.0
        %438 = vmatpush2.msra.mxu0 0.0
        %439 = vmatprep.subr.mxu0 0.0
        %440 = vmatpush2.msra.mxu0 0.0
        %441 = vmatprep.subr.mxu0 0.0
        %442 = vmatpush2.msra.mxu0 0.0
        %443 = vmatprep.subr.mxu0 0.0
        %444 = vmatpush2.msra.mxu0 0.0
        %445 = vmatprep.subr.mxu0 0.0
        %446 = vmatpush2.msra.mxu0 0.0
        %447 = vmatprep.subr.mxu0 0.0
        %448 = vmatpush2.msra.mxu0 0.0
        %449 = vmatprep.subr.mxu0 0.0
        %450 = vmatpush2.msra.mxu0 0.0
        %451 = vmatprep.subr.mxu0 0.0
        %452 = vmatpush2.msra.mxu0 0.0
        %453 = vmatprep.subr.mxu0 0.0
        %454 = vmatpush2.msra.mxu0 0.0
        %455 = vmatprep.subr.mxu0 0.0
        %456 = vmatpush2.msra.mxu0 0.0
        %457 = vmatprep.subr.mxu0 0.0
        %458 = vmatpush2.msra.mxu0 0.0
        %459 = vmatprep.subr.mxu0 0.0
        %460 = vmatpush2.msra.mxu0 0.0
        %461 = vmatprep.mubr.f32.mxu0 0.0
        %462 = vmatmul.mubr.f32.gmra.mxu0 %v382
        %v463 = vpop.f32.mrf.mxu0
        %v464 = vadd.f32 0.0, %v463
        %v465 = vpop.f32.mrf.mxu0
        %466 = vmatprep.mubr.f32.mxu0 0.0
        %467 = vmatmul.mubr.f32.gmra.mxu0 %v385
        %v468 = vpop.f32.mrf.mxu0
        %v469 = vadd.f32 0.0, %v468
        %v470 = vpop.f32.mrf.mxu0
        %471 = vmatprep.mubr.f32.mxu0 0.0
        %472 = vmatmul.mubr.f32.gmra.mxu0 %v388
        %v473 = vpop.f32.mrf.mxu0
        %v474 = vadd.f32 0.0, %v473
        %v475 = vpop.f32.mrf.mxu0
        %476 = vmatprep.mubr.f32.mxu0 0.0
        %477 = vmatmul.mubr.f32.gmra.mxu0 %v391
        %v478 = vpop.f32.mrf.mxu0
        %v479 = vadd.f32 0.0, %v478
        %v480 = vpop.f32.mrf.mxu0
        %481 = vdwg.mxu0
        %v482 = vsel %vm380, %v464, 0.0
        %483 = vadd.xlane.f32.xlu0 %v482
        %v484 = vpop.xlane.xlu0 %483
        %v485 = vsel %vm380, %v469, 0.0
        %486 = vadd.xlane.f32.xlu0 %v485
        %v487 = vpop.xlane.xlu0 %486
        %v488 = vsel %vm380, %v474, 0.0
        %489 = vadd.xlane.f32.xlu0 %v488
        %v490 = vpop.xlane.xlu0 %489
        %v491 = vsel %vm380, %v479, 0.0
        %492 = vadd.xlane.f32.xlu0 %v491
        %v493 = vpop.xlane.xlu0 %492
        %v494 = vxor.u32 %v484, 2147483648
        %v495 = vxor.u32 %v487, 2147483648
        %v496 = vxor.u32 %v490, 2147483648
        %v497 = vxor.u32 %v493, 2147483648
        %v498 = vmul.f32 %v494, 1.442695
        %v499 = vpow.pop %v498
        %v500 = vmul.f32 %v495, 1.442695
        %v501 = vpow.pop %v500
        %v502 = vmul.f32 %v496, 1.442695
        %v503 = vpow.pop %v502
        %v504 = vmul.f32 %v497, 1.442695
        %v505 = vpow.pop %v504
        %v506 = vadd.f32 %v499, 1.0
        %v507 = vadd.f32 %v501, 1.0
        %v508 = vadd.f32 %v503, 1.0
        %v509 = vadd.f32 %v505, 1.0
        %v510 = vrcp.pop %v506
        %v511 = vmul.f32 1.0, %v510
        %v512 = vrcp.pop %v507
        %v513 = vmul.f32 1.0, %v512
        %v514 = vrcp.pop %v508
        %v515 = vmul.f32 1.0, %v514
        %v516 = vrcp.pop %v509
        %v517 = vmul.f32 1.0, %v516
        %v518 = vmul.f32 %v258, %v511
        %v519 = vmul.f32 %v259, %v511
        %v520 = vmul.f32 %v260, %v513
        %v521 = vmul.f32 %v261, %v513
        %v522 = vmul.f32 %v262, %v515
        %v523 = vmul.f32 %v263, %v515
        %v524 = vmul.f32 %v264, %v517
        %v525 = vmul.f32 %v265, %v517
        %v526 = vadd.f32 %v518, %v520
        %v527 = vadd.f32 %v526, %v522
        %v528 = vadd.f32 %v527, %v524
        %v529 = vrot.slane %v528, 4
        %v530 = vadd.f32 %v528, %v529
        %v531 = vrot.slane %v530, 2
        %v532 = vadd.f32 %v530, %v531
        %v533 = vrot.slane %v532, 1
        %v534 = vadd.f32 %v532, %v533
        %v535 = vadd.f32 %v519, %v521
        %v536 = vadd.f32 %v535, %v523
        %v537 = vadd.f32 %v536, %v525
        %v538 = vrot.slane %v537, 4
        %v539 = vadd.f32 %v537, %v538
        %v540 = vrot.slane %v539, 2
        %v541 = vadd.f32 %v539, %v540
        %v542 = vrot.slane %v541, 1
        %v543 = vadd.f32 %v541, %v542
        %v544 = vrcp.pop 32.0
        %v545 = vmul.f32 %v534, %v544
        %v546 = vmul.f32 %v543, %v544
        %v547 = vmax.f32 %v518, %v522
        %v548 = vmax.f32 %v520, %v524
        %v549 = vmax.f32 %v547, %v548
        %v550 = vrot.slane %v549, 4
        %v551 = vmax.f32 %v549, %v550
        %v552 = vrot.slane %v551, 2
        %v553 = vmax.f32 %v551, %v552
        %v554 = vrot.slane %v553, 1
        %v555 = vmax.f32 %v553, %v554
        %v556 = vmax.f32 %v519, %v523
        %v557 = vmax.f32 %v521, %v525
        %v558 = vmax.f32 %v556, %v557
        %v559 = vrot.slane %v558, 4
        %v560 = vmax.f32 %v558, %v559
        %v561 = vrot.slane %v560, 2
        %v562 = vmax.f32 %v560, %v561
        %v563 = vrot.slane %v562, 1
        %v564 = vmax.f32 %v562, %v563
        %v565 = vld [vmem:[#allocation5] sm:$0xff]
        %v566 = vld [vmem:[#allocation5 + $0x8] sm:$0xff]
        %v567 = vld [vmem:[#allocation5 + $0x10] sm:$0xff]
        %v568 = vld [vmem:[#allocation5 + $0x18] sm:$0xff]
        %v569 = vld [vmem:[#allocation5 + $0x20] sm:$0xff]
        %v570 = vld [vmem:[#allocation5 + $0x28] sm:$0xff]
        %v571 = vld [vmem:[#allocation5 + $0x30] sm:$0xff]
        %v572 = vld [vmem:[#allocation5 + $0x38] sm:$0xff]
        %v573 = vld [vmem:[#allocation5 + $0x40] sm:$0xff]
        %v574 = vld [vmem:[#allocation5 + $0x48] sm:$0xff]
        %v575 = vld [vmem:[#allocation5 + $0x50] sm:$0xff]
        %v576 = vld [vmem:[#allocation5 + $0x58] sm:$0xff]
        %v577 = vld [vmem:[#allocation5 + $0x60] sm:$0xff]
        %v578 = vld [vmem:[#allocation5 + $0x68] sm:$0xff]
        %v579 = vld [vmem:[#allocation5 + $0x70] sm:$0xff]
        %v580 = vld [vmem:[#allocation5 + $0x78] sm:$0xff]
        %v581 = vld [vmem:[#allocation5 + $0x80] sm:$0xff]
        %v582 = vld [vmem:[#allocation5 + $0x88] sm:$0xff]
        %v583 = vld [vmem:[#allocation5 + $0x90] sm:$0xff]
        %v584 = vld [vmem:[#allocation5 + $0x98] sm:$0xff]
        %v585 = vld [vmem:[#allocation5 + $0xa0] sm:$0xff]
        %v586 = vld [vmem:[#allocation5 + $0xa8] sm:$0xff]
        %v587 = vld [vmem:[#allocation5 + $0xb0] sm:$0xff]
        %v588 = vld [vmem:[#allocation5 + $0xb8] sm:$0xff]
        %v589 = vld [vmem:[#allocation5 + $0xc0] sm:$0xff]
        %v590 = vld [vmem:[#allocation5 + $0xc8] sm:$0xff]
        %v591 = vld [vmem:[#allocation5 + $0xd0] sm:$0xff]
        %v592 = vld [vmem:[#allocation5 + $0xd8] sm:$0xff]
        %v593 = vld [vmem:[#allocation5 + $0xe0] sm:$0xff]
        %v594 = vld [vmem:[#allocation5 + $0xe8] sm:$0xff]
        %v595 = vld [vmem:[#allocation5 + $0xf0] sm:$0xff]
        %v596 = vld [vmem:[#allocation5 + $0xf8] sm:$0xff]
        %v597 = vld [vmem:[#allocation5 + $0x100] sm:$0xff]
        %v598 = vld [vmem:[#allocation5 + $0x108] sm:$0xff]
        %v599 = vld [vmem:[#allocation5 + $0x110] sm:$0xff]
        %v600 = vld [vmem:[#allocation5 + $0x118] sm:$0xff]
        %v601 = vld [vmem:[#allocation5 + $0x120] sm:$0xff]
        %v602 = vld [vmem:[#allocation5 + $0x128] sm:$0xff]
        %v603 = vld [vmem:[#allocation5 + $0x130] sm:$0xff]
        %v604 = vld [vmem:[#allocation5 + $0x138] sm:$0xff]
        %v605 = vld [vmem:[#allocation5 + $0x140] sm:$0xff]
        %v606 = vld [vmem:[#allocation5 + $0x148] sm:$0xff]
        %v607 = vld [vmem:[#allocation5 + $0x150] sm:$0xff]
        %v608 = vld [vmem:[#allocation5 + $0x158] sm:$0xff]
        %v609 = vld [vmem:[#allocation5 + $0x160] sm:$0xff]
        %v610 = vld [vmem:[#allocation5 + $0x168] sm:$0xff]
        %v611 = vld [vmem:[#allocation5 + $0x170] sm:$0xff]
        %v612 = vld [vmem:[#allocation5 + $0x178] sm:$0xff]
        %v613 = vld [vmem:[#allocation5 + $0x180] sm:$0xff]
        %v614 = vld [vmem:[#allocation5 + $0x188] sm:$0xff]
        %v615 = vld [vmem:[#allocation5 + $0x190] sm:$0xff]
        %v616 = vld [vmem:[#allocation5 + $0x198] sm:$0xff]
        %v617 = vld [vmem:[#allocation5 + $0x1a0] sm:$0xff]
        %v618 = vld [vmem:[#allocation5 + $0x1a8] sm:$0xff]
        %v619 = vld [vmem:[#allocation5 + $0x1b0] sm:$0xff]
        %v620 = vld [vmem:[#allocation5 + $0x1b8] sm:$0xff]
        %v621 = vld [vmem:[#allocation5 + $0x1c0] sm:$0xff]
        %v622 = vld [vmem:[#allocation5 + $0x1c8] sm:$0xff]
        %v623 = vld [vmem:[#allocation5 + $0x1d0] sm:$0xff]
        %v624 = vld [vmem:[#allocation5 + $0x1d8] sm:$0xff]
        %v625 = vld [vmem:[#allocation5 + $0x1e0] sm:$0xff]
        %v626 = vld [vmem:[#allocation5 + $0x1e8] sm:$0xff]
        %v627 = vld [vmem:[#allocation5 + $0x1f0] sm:$0xff]
        %v628 = vld [vmem:[#allocation5 + $0x1f8] sm:$0xff]
        %v629 = vld [vmem:[#allocation5 + $0x200] sm:$0xff]
        %v630 = vld [vmem:[#allocation5 + $0x208] sm:$0xff]
        %v631 = vld [vmem:[#allocation5 + $0x210] sm:$0xff]
        %v632 = vld [vmem:[#allocation5 + $0x218] sm:$0xff]
        %v633 = vld [vmem:[#allocation5 + $0x220] sm:$0xff]
        %v634 = vld [vmem:[#allocation5 + $0x228] sm:$0xff]
        %v635 = vld [vmem:[#allocation5 + $0x230] sm:$0xff]
        %v636 = vld [vmem:[#allocation5 + $0x238] sm:$0xff]
        %v637 = vld [vmem:[#allocation5 + $0x240] sm:$0xff]
        %v638 = vld [vmem:[#allocation5 + $0x248] sm:$0xff]
        %v639 = vld [vmem:[#allocation5 + $0x250] sm:$0xff]
        %v640 = vld [vmem:[#allocation5 + $0x258] sm:$0xff]
        %v641 = vld [vmem:[#allocation5 + $0x260] sm:$0xff]
        %v642 = vld [vmem:[#allocation5 + $0x268] sm:$0xff]
        %v643 = vld [vmem:[#allocation5 + $0x270] sm:$0xff]
        %v644 = vld [vmem:[#allocation5 + $0x278] sm:$0xff]
        %v645 = vld [vmem:[#allocation5 + $0x280] sm:$0xff]
        %v646 = vld [vmem:[#allocation5 + $0x288] sm:$0xff]
        %v647 = vld [vmem:[#allocation5 + $0x290] sm:$0xff]
        %v648 = vld [vmem:[#allocation5 + $0x298] sm:$0xff]
        %v649 = vld [vmem:[#allocation5 + $0x2a0] sm:$0xff]
        %v650 = vld [vmem:[#allocation5 + $0x2a8] sm:$0xff]
        %v651 = vld [vmem:[#allocation5 + $0x2b0] sm:$0xff]
        %v652 = vld [vmem:[#allocation5 + $0x2b8] sm:$0xff]
        %v653 = vld [vmem:[#allocation5 + $0x2c0] sm:$0xff]
        %v654 = vld [vmem:[#allocation5 + $0x2c8] sm:$0xff]
        %v655 = vld [vmem:[#allocation5 + $0x2d0] sm:$0xff]
        %v656 = vld [vmem:[#allocation5 + $0x2d8] sm:$0xff]
        %v657 = vld [vmem:[#allocation5 + $0x2e0] sm:$0xff]
        %v658 = vld [vmem:[#allocation5 + $0x2e8] sm:$0xff]
        %v659 = vld [vmem:[#allocation5 + $0x2f0] sm:$0xff]
        %v660 = vld [vmem:[#allocation5 + $0x2f8] sm:$0xff]
        %v661 = vld [vmem:[#allocation5 + $0x300] sm:$0xff]
        %v662 = vld [vmem:[#allocation5 + $0x308] sm:$0xff]
        %v663 = vld [vmem:[#allocation5 + $0x310] sm:$0xff]
        %v664 = vld [vmem:[#allocation5 + $0x318] sm:$0xff]
        %v665 = vld [vmem:[#allocation5 + $0x320] sm:$0xff]
        %v666 = vld [vmem:[#allocation5 + $0x328] sm:$0xff]
        %v667 = vld [vmem:[#allocation5 + $0x330] sm:$0xff]
        %v668 = vld [vmem:[#allocation5 + $0x338] sm:$0xff]
        %v669 = vld [vmem:[#allocation5 + $0x340] sm:$0xff]
        %v670 = vld [vmem:[#allocation5 + $0x348] sm:$0xff]
        %v671 = vld [vmem:[#allocation5 + $0x350] sm:$0xff]
        %v672 = vld [vmem:[#allocation5 + $0x358] sm:$0xff]
        %v673 = vld [vmem:[#allocation5 + $0x360] sm:$0xff]
        %v674 = vld [vmem:[#allocation5 + $0x368] sm:$0xff]
        %v675 = vld [vmem:[#allocation5 + $0x370] sm:$0xff]
        %v676 = vld [vmem:[#allocation5 + $0x378] sm:$0xff]
        %v677 = vld [vmem:[#allocation5 + $0x380] sm:$0xff]
        %v678 = vld [vmem:[#allocation5 + $0x388] sm:$0xff]
        %v679 = vld [vmem:[#allocation5 + $0x390] sm:$0xff]
        %v680 = vld [vmem:[#allocation5 + $0x398] sm:$0xff]
        %v681 = vld [vmem:[#allocation5 + $0x3a0] sm:$0xff]
        %v682 = vld [vmem:[#allocation5 + $0x3a8] sm:$0xff]
        %v683 = vld [vmem:[#allocation5 + $0x3b0] sm:$0xff]
        %v684 = vld [vmem:[#allocation5 + $0x3b8] sm:$0xff]
        %v685 = vld [vmem:[#allocation5 + $0x3c0] sm:$0xff]
        %v686 = vld [vmem:[#allocation5 + $0x3c8] sm:$0xff]
        %v687 = vld [vmem:[#allocation5 + $0x3d0] sm:$0xff]
        %v688 = vld [vmem:[#allocation5 + $0x3d8] sm:$0xff]
        %v689 = vld [vmem:[#allocation5 + $0x3e0] sm:$0xff]
        %v690 = vld [vmem:[#allocation5 + $0x3e8] sm:$0xff]
        %v691 = vld [vmem:[#allocation5 + $0x3f0] sm:$0xff]
        %v692 = vld [vmem:[#allocation5 + $0x3f8] sm:$0xff]
        %693 = vmatprep.subr.mxu0 %v596
        %694 = vmatpush1.msra.mxu0 %v595
        %695 = vmatprep.subr.mxu0 %v594
        %696 = vmatpush1.msra.mxu0 %v593
        %697 = vmatprep.subr.mxu0 %v592
        %698 = vmatpush1.msra.mxu0 %v591
        %699 = vmatprep.subr.mxu0 %v590
        %700 = vmatpush1.msra.mxu0 %v589
        %701 = vmatprep.subr.mxu0 %v588
        %702 = vmatpush1.msra.mxu0 %v587
        %703 = vmatprep.subr.mxu0 %v586
        %704 = vmatpush1.msra.mxu0 %v585
        %705 = vmatprep.subr.mxu0 %v584
        %706 = vmatpush1.msra.mxu0 %v583
        %707 = vmatprep.subr.mxu0 %v582
        %708 = vmatpush1.msra.mxu0 %v581
        %709 = vmatprep.subr.mxu0 %v580
        %710 = vmatpush1.msra.mxu0 %v579
        %711 = vmatprep.subr.mxu0 %v578
        %712 = vmatpush1.msra.mxu0 %v577
        %713 = vmatprep.subr.mxu0 %v576
        %714 = vmatpush1.msra.mxu0 %v575
        %715 = vmatprep.subr.mxu0 %v574
        %716 = vmatpush1.msra.mxu0 %v573
        %717 = vmatprep.subr.mxu0 %v572
        %718 = vmatpush1.msra.mxu0 %v571
        %719 = vmatprep.subr.mxu0 %v570
        %720 = vmatpush1.msra.mxu0 %v569
        %721 = vmatprep.subr.mxu0 %v568
        %722 = vmatpush1.msra.mxu0 %v567
        %723 = vmatprep.subr.mxu0 %v566
        %724 = vmatpush1.msra.mxu0 %v565
        %725 = vmatprep.subr.mxu0 %v628
        %726 = vmatpush2.msra.mxu0 %v627
        %727 = vmatprep.subr.mxu0 %v626
        %728 = vmatpush2.msra.mxu0 %v625
        %729 = vmatprep.subr.mxu0 %v624
        %730 = vmatpush2.msra.mxu0 %v623
        %731 = vmatprep.subr.mxu0 %v622
        %732 = vmatpush2.msra.mxu0 %v621
        %733 = vmatprep.subr.mxu0 %v620
        %734 = vmatpush2.msra.mxu0 %v619
        %735 = vmatprep.subr.mxu0 %v618
        %736 = vmatpush2.msra.mxu0 %v617
        %737 = vmatprep.subr.mxu0 %v616
        %738 = vmatpush2.msra.mxu0 %v615
        %739 = vmatprep.subr.mxu0 %v614
        %740 = vmatpush2.msra.mxu0 %v613
        %741 = vmatprep.subr.mxu0 %v612
        %742 = vmatpush2.msra.mxu0 %v611
        %743 = vmatprep.subr.mxu0 %v610
        %744 = vmatpush2.msra.mxu0 %v609
        %745 = vmatprep.subr.mxu0 %v608
        %746 = vmatpush2.msra.mxu0 %v607
        %747 = vmatprep.subr.mxu0 %v606
        %748 = vmatpush2.msra.mxu0 %v605
        %749 = vmatprep.subr.mxu0 %v604
        %750 = vmatpush2.msra.mxu0 %v603
        %751 = vmatprep.subr.mxu0 %v602
        %752 = vmatpush2.msra.mxu0 %v601
        %753 = vmatprep.subr.mxu0 %v600
        %754 = vmatpush2.msra.mxu0 %v599
        %755 = vmatprep.subr.mxu0 %v598
        %756 = vmatpush2.msra.mxu0 %v597
        %757 = vmatprep.mubr.f32.mxu0 %v546
        %758 = vmatmul.mubr.f32.gmra.mxu0 %v545
        %v759 = vpop.f32.mrf.mxu0
        %v760 = vadd.f32 0.0, %v759
        %v761 = vpop.f32.mrf.mxu0
        %v762 = vadd.f32 0.0, %v761
        %763 = vdwg.mxu0
        %764 = vmatprep.subr.mxu0 %v660
        %765 = vmatpush1.msra.mxu0 %v659
        %766 = vmatprep.subr.mxu0 %v658
        %767 = vmatpush1.msra.mxu0 %v657
        %768 = vmatprep.subr.mxu0 %v656
        %769 = vmatpush1.msra.mxu0 %v655
        %770 = vmatprep.subr.mxu0 %v654
        %771 = vmatpush1.msra.mxu0 %v653
        %772 = vmatprep.subr.mxu0 %v652
        %773 = vmatpush1.msra.mxu0 %v651
        %774 = vmatprep.subr.mxu0 %v650
        %775 = vmatpush1.msra.mxu0 %v649
        %776 = vmatprep.subr.mxu0 %v648
        %777 = vmatpush1.msra.mxu0 %v647
        %778 = vmatprep.subr.mxu0 %v646
        %779 = vmatpush1.msra.mxu0 %v645
        %780 = vmatprep.subr.mxu0 %v644
        %781 = vmatpush1.msra.mxu0 %v643
        %782 = vmatprep.subr.mxu0 %v642
        %783 = vmatpush1.msra.mxu0 %v641
        %784 = vmatprep.subr.mxu0 %v640
        %785 = vmatpush1.msra.mxu0 %v639
        %786 = vmatprep.subr.mxu0 %v638
        %787 = vmatpush1.msra.mxu0 %v637
        %788 = vmatprep.subr.mxu0 %v636
        %789 = vmatpush1.msra.mxu0 %v635
        %790 = vmatprep.subr.mxu0 %v634
        %791 = vmatpush1.msra.mxu0 %v633
        %792 = vmatprep.subr.mxu0 %v632
        %793 = vmatpush1.msra.mxu0 %v631
        %794 = vmatprep.subr.mxu0 %v630
        %795 = vmatpush1.msra.mxu0 %v629
        %796 = vmatprep.subr.mxu0 %v692
        %797 = vmatpush2.msra.mxu0 %v691
        %798 = vmatprep.subr.mxu0 %v690
        %799 = vmatpush2.msra.mxu0 %v689
        %800 = vmatprep.subr.mxu0 %v688
        %801 = vmatpush2.msra.mxu0 %v687
        %802 = vmatprep.subr.mxu0 %v686
        %803 = vmatpush2.msra.mxu0 %v685
        %804 = vmatprep.subr.mxu0 %v684
        %805 = vmatpush2.msra.mxu0 %v683
        %806 = vmatprep.subr.mxu0 %v682
        %807 = vmatpush2.msra.mxu0 %v681
        %808 = vmatprep.subr.mxu0 %v680
        %809 = vmatpush2.msra.mxu0 %v679
        %810 = vmatprep.subr.mxu0 %v678
        %811 = vmatpush2.msra.mxu0 %v677
        %812 = vmatprep.subr.mxu0 %v676
        %813 = vmatpush2.msra.mxu0 %v675
        %814 = vmatprep.subr.mxu0 %v674
        %815 = vmatpush2.msra.mxu0 %v673
        %816 = vmatprep.subr.mxu0 %v672
        %817 = vmatpush2.msra.mxu0 %v671
        %818 = vmatprep.subr.mxu0 %v670
        %819 = vmatpush2.msra.mxu0 %v669
        %820 = vmatprep.subr.mxu0 %v668
        %821 = vmatpush2.msra.mxu0 %v667
        %822 = vmatprep.subr.mxu0 %v666
        %823 = vmatpush2.msra.mxu0 %v665
        %824 = vmatprep.subr.mxu0 %v664
        %825 = vmatpush2.msra.mxu0 %v663
        %826 = vmatprep.subr.mxu0 %v662
        %827 = vmatpush2.msra.mxu0 %v661
        %828 = vmatprep.mubr.f32.mxu0 %v564
        %829 = vmatmul.mubr.f32.gmra.mxu0 %v555
        %v830 = vpop.f32.mrf.mxu0
        %v831 = vadd.f32 %v760, %v830
        %v832 = vpop.f32.mrf.mxu0
        %v833 = vadd.f32 %v762, %v832
        %834 = vdwg.mxu0
        %v835 = vxor.u32 %v831, 2147483648
        %v836 = vxor.u32 %v833, 2147483648
        %v837 = vmul.f32 %v835, 1.442695
        %v838 = vpow.pop %v837
        %v839 = vmul.f32 %v836, 1.442695
        %v840 = vpow.pop %v839
        %v841 = vadd.f32 %v838, 1.0
        %v842 = vadd.f32 %v840, 1.0
        %v843 = vrcp.pop %v841
        %v844 = vmul.f32 1.0, %v843
        %v845 = vrcp.pop %v842
        %v846 = vmul.f32 1.0, %v845
        %v847 = vlaneseq
        %v848 = vshrl.u32 %v847, 7
        %v849 = vsub.s32 0, %v848
        %v850 = vrot.slane %v844, %v849
        %v851 = vlaneseq
        %v852 = vshrl.u32 %v851, 7
        %v853 = vsub.s32 0, %v852
        %v854 = vrot.slane %v846, %v853
        %v855 = vmul.f32 %v518, %v850
        %v856 = vmul.f32 %v519, %v854
        %v857 = vmul.f32 %v520, %v850
        %v858 = vmul.f32 %v521, %v854
        %v859 = vmul.f32 %v522, %v850
        %v860 = vmul.f32 %v523, %v854
        %v861 = vmul.f32 %v524, %v850
        %v862 = vmul.f32 %v525, %v854
        %v863 = vld [vmem:[%s4] sm:$0xff]
        %v864 = vld [vmem:[%s4 + $0x8] sm:$0xff]
        %v866 = vsel %vm301, %v863, 0
        %v869 = vsel %vm301, %v864, 0
        %871 = vmatprep.subr.mxu0 0.0
        %872 = vmatpush1.msra.mxu0 0.0
        %873 = vmatprep.subr.mxu0 0.0
        %874 = vmatpush1.msra.mxu0 0.0
        %875 = vmatprep.subr.mxu0 0.0
        %876 = vmatpush1.msra.mxu0 0.0
        %877 = vmatprep.subr.mxu0 0.0
        %878 = vmatpush1.msra.mxu0 0.0
        %879 = vmatprep.subr.mxu0 0.0
        %880 = vmatpush1.msra.mxu0 0.0
        %881 = vmatprep.subr.mxu0 0.0
        %882 = vmatpush1.msra.mxu0 0.0
        %883 = vmatprep.subr.mxu0 0.0
        %884 = vmatpush1.msra.mxu0 0.0
        %885 = vmatprep.subr.mxu0 0.0
        %886 = vmatpush1.msra.mxu0 0.0
        %887 = vmatprep.subr.mxu0 0.0
        %888 = vmatpush1.msra.mxu0 0.0
        %889 = vmatprep.subr.mxu0 0.0
        %890 = vmatpush1.msra.mxu0 0.0
        %891 = vmatprep.subr.mxu0 0.0
        %892 = vmatpush1.msra.mxu0 0.0
        %893 = vmatprep.subr.mxu0 0.0
        %894 = vmatpush1.msra.mxu0 0.0
        %895 = vmatprep.subr.mxu0 %v862
        %896 = vmatpush1.msra.mxu0 %v861
        %897 = vmatprep.subr.mxu0 %v860
        %898 = vmatpush1.msra.mxu0 %v859
        %899 = vmatprep.subr.mxu0 %v858
        %900 = vmatpush1.msra.mxu0 %v857
        %901 = vmatprep.subr.mxu0 %v856
        %902 = vmatpush1.msra.mxu0 %v855
        %903 = vmatprep.subr.mxu0 0.0
        %904 = vmatpush2.msra.mxu0 0.0
        %905 = vmatprep.subr.mxu0 0.0
        %906 = vmatpush2.msra.mxu0 0.0
        %907 = vmatprep.subr.mxu0 0.0
        %908 = vmatpush2.msra.mxu0 0.0
        %909 = vmatprep.subr.mxu0 0.0
        %910 = vmatpush2.msra.mxu0 0.0
        %911 = vmatprep.subr.mxu0 0.0
        %912 = vmatpush2.msra.mxu0 0.0
        %913 = vmatprep.subr.mxu0 0.0
        %914 = vmatpush2.msra.mxu0 0.0
        %915 = vmatprep.subr.mxu0 0.0
        %916 = vmatpush2.msra.mxu0 0.0
        %917 = vmatprep.subr.mxu0 0.0
        %918 = vmatpush2.msra.mxu0 0.0
        %919 = vmatprep.subr.mxu0 0.0
        %920 = vmatpush2.msra.mxu0 0.0
        %921 = vmatprep.subr.mxu0 0.0
        %922 = vmatpush2.msra.mxu0 0.0
        %923 = vmatprep.subr.mxu0 0.0
        %924 = vmatpush2.msra.mxu0 0.0
        %925 = vmatprep.subr.mxu0 0.0
        %926 = vmatpush2.msra.mxu0 0.0
        %927 = vmatprep.subr.mxu0 0.0
        %928 = vmatpush2.msra.mxu0 0.0
        %929 = vmatprep.subr.mxu0 0.0
        %930 = vmatpush2.msra.mxu0 0.0
        %931 = vmatprep.subr.mxu0 0.0
        %932 = vmatpush2.msra.mxu0 0.0
        %933 = vmatprep.subr.mxu0 0.0
        %934 = vmatpush2.msra.mxu0 0.0
        %935 = vmatprep.mubr.f32.mxu0 0.0
        %936 = vmatmul.mubr.f32.gmra.mxu0 %v866
        %v937 = vpop.f32.mrf.mxu0
        %v938 = vadd.f32 0.0, %v937
        %v939 = vpop.f32.mrf.mxu0
        %v940 = vadd.f32 0.0, %v939
        %941 = vmatprep.mubr.f32.mxu0 0.0
        %942 = vmatmul.mubr.f32.gmra.mxu0 %v869
        %v943 = vpop.f32.mrf.mxu0
        %v944 = vadd.f32 0.0, %v943
        %v945 = vpop.f32.mrf.mxu0
        %v946 = vadd.f32 0.0, %v945
        %947 = vdwg.mxu0
        %948 = vst [vmem:[%s257] sm:$0xff] %v938
        %949 = vst [vmem:[%s257 + $0x8] sm:$0xff] %v940
        %950 = vst [vmem:[%s257 + $0x10] sm:$0xff] %v944
        %951 = vst [vmem:[%s257 + $0x18] sm:$0xff] %v946
        %s952 = sand.u32 %s141, 1
        %s953 = scalar_lea.sflag [#allocation4], %s952
        %s954 = sand.u32 %s141, 1
        %s955 = smul.addr %s954, 32
        %s956 = scalar_lea.vmem [#allocation7], %s955
        // Predicated region
        $region49: #{tpu_custom_call.1} parent=39 // pred_check
          %p957 = pneg %p151
        $region50: #{tpu_custom_call.1} parent=39 // pred_check_branch
          %959 = sbr.rel (%p957) target = $region52
        $region51: #{tpu_custom_call.1} parent=39 // pred_region
          %s961 = ssub.s32 512, 512
          %962 = vsyncadd %s953, %s961
          %s963 = smul.addr %s23, 4
          %s964 = smul.addr %s963, 128
          %s965 = scalar_lea.hbm %s5, %s964
          %s966 = sshll.u32 %s956, 4
          %s967 = int_to_ptr.vmem [resolvable:$true] %s966
          %972 = dma.vmem_to_hbm [thread:$0]  %s967, 512, %s965, %s953, 256, 256, 16
        $region52: #{tpu_custom_call.1} parent=39 // pred_fallthru
          _
      $region40: #{tpu_custom_call.1} parent=5 // pred_fallthru
        _
      %p973 = scmp.le.s32.totalorder 2, %s18
      // Predicated region
      $region53: #{tpu_custom_call.1} parent=5 // pred_check
        %p974 = pneg %p973
      $region54: #{tpu_custom_call.1} parent=5 // pred_check_branch
        %976 = sbr.rel (%p974) target = $region56
      $region55: #{tpu_custom_call.1} parent=5 // pred_region
        %s977 = ssub.s32 %s18, 2
        // Predicated region
        $region57: #{tpu_custom_call.1} parent=55 // pred_check
          %p978 = pneg %p157
        $region58: #{tpu_custom_call.1} parent=55 // pred_check_branch
          %980 = sbr.rel (%p978) target = $region60
        $region59: #{tpu_custom_call.1} parent=55 // pred_region
          %s981 = sand.u32 %s142, 1
          %s982 = scalar_lea.sflag [#allocation4], %s981
          %s983 = sand.u32 %s142, 1
          %s984 = smul.addr %s983, 32
          %s985 = scalar_lea.vmem [#allocation7], %s984
          %986 = dma.done %s982, 512
        $region60: #{tpu_custom_call.1} parent=55 // pred_fallthru
          _
      $region56: #{tpu_custom_call.1} parent=5 // pred_fallthru
        _
    $region6: #{tpu_custom_call.1} parent=1 // loop_footer
      %s22 = sadd.s32 1, %s18
    $region7: #{tpu_custom_call.1} parent=1 // loop_footer_branch
      %17 = sbr.rel target = $region3
    $region8: #{tpu_custom_call.1} parent=1 // loop_exit
      _
    %987 = vsyncpa [#allocation3], 1
    %s988 = scalar_lea.sflag [#allocation3], 1
    %989 = vsyncpa %s988, 1
    %990 = vsyncpa [#allocation6], 1
    %991 = vsyncpa [#allocation4], 1
    %s992 = scalar_lea.sflag [#allocation4], 1
    %993 = vsyncpa %s992, 1

</llo_original>
